<compile_context>
chip_gen: v6e
topology: v6e:2x2x1
jax: 0.10.0
libtpu: 0.0.40
codegen_flags: <defaults>
</compile_context>

<pallas_src>
import math

import jax
import jax.numpy as jnp
from jax import lax
from jax.experimental import pallas as pl
from jax.experimental.pallas import tpu as pltpu


# ----------------------------------------------------------------------------
# Kernel A: fused in_proj (bf16 MXU) + causal depthwise short filter + gate 1
# ----------------------------------------------------------------------------
def hyena_proj_kernel(u_cur_ref, u_halo_ref, w_in_ref, b_in_ref, sfw_ref, sfb_ref,
                      x0_ref, vg_ref):
    f32 = jnp.float32
    i = pl.program_id(1)
    T, D = u_cur_ref.shape[1], u_cur_ref.shape[2]
    H = 8  # sublane-aligned halo rows (only the last 2 are actually used)

    w_in = w_in_ref[...]                                     # (D, 3D) bf16
    b_in = b_in_ref[...]                                     # (1, 3D) f32

    # Fused in_proj for all three channel groups in one MXU push.
    z_cur = jnp.dot(u_cur_ref[0], w_in, preferred_element_type=f32) + b_in   # (T, 3D)

    # Halo = in_proj of the last 8 rows of the previous tile (8-row DMA only).
    # Conv1d pads z with TRUE zeros, so tile 0's history must be 0 (not b_in).
    z_tail = jnp.dot(u_halo_ref[0], w_in, preferred_element_type=f32) + b_in  # (8, 3D)
    z_tail = z_tail * (i > 0).astype(f32)

    # Haloed slab; k=3 causal taps become static sublane-offset slices.
    z_ext = jnp.concatenate([z_tail, z_cur], axis=0)         # (T+8, 3D) f32
    z2 = z_ext[H - 2:T + H - 2]                              # z[t-2]
    z1 = z_ext[H - 1:T + H - 1]                              # z[t-1]

    # Depthwise short filter taps [t-2, t-1, t] + bias (f32 VPU).
    uc = (sfw_ref[0:1] * z2 + sfw_ref[1:2] * z1 + sfw_ref[2:3] * z_cur
          + sfb_ref[...])                                    # (T, 3D)

    x0 = uc[:, :D]
    x1 = uc[:, D:2 * D]
    v = uc[:, 2 * D:]
    x0_ref[0] = x0.astype(x0_ref.dtype)                      # bf16 store
    vg_ref[0] = (v * x1).astype(vg_ref.dtype)                # first gate (dropout p=0)


# ----------------------------------------------------------------------------
# Kernel B: tiled causal long conv (triangular grid) + bias residual + gate 2
#           + out_proj.   kwin_ref[0, j] = k_filt[(q-s)*T + j - T] (first-T
#           rows of the g=0 window are zero -> lag<0 masked on the diagonal).
# ----------------------------------------------------------------------------
def hyena_longconv_kernel(qtab_ref, stab_ref,
                          x0_ref, vgq_ref, vgs_ref, kwin_ref, fbias_ref,
                          w_out_ref, b_out_ref, o_ref, acc_ref):
    f32 = jnp.float32
    p = pl.program_id(1)
    q = qtab_ref[p]
    s = stab_ref[p]
    T, D = vgs_ref.shape[1], vgs_ref.shape[2]

    @pl.when(s == 0)
    def _init():
        acc_ref[...] = jnp.zeros_like(acc_ref)

    nchunks = T // 8

    def chunk_body(c, carry):
        # 8-aligned window of the k slab covering all lags for these 8 rows.
        off = pl.multiple_of(T - 8 * c - 8, 8)
        slab = kwin_ref[0, pl.ds(off, T + 8), :]                          # (T+8, D) f32
        vr = vgs_ref[0, pl.ds(pl.multiple_of(8 * c, 8), 8), :].astype(f32)  # (8, D)
        # 8 lag-shifted views are static sublane slices (XLU), not new loads.
        contrib = slab[8:8 + T, :] * vr[0:1, :]
        for r in range(1, 8):
            contrib = contrib + slab[8 - r:8 - r + T, :] * vr[r:r + 1, :]
        acc_ref[...] += contrib                                           # 1 RMW / chunk
        return carry

    lax.fori_loop(0, nchunks, chunk_body, 0, unroll=nchunks <= 8)

    @pl.when(s == q)
    def _finalize():
        vconv = acc_ref[...] + fbias_ref[...] * vgq_ref[0].astype(f32)    # conv + bias*u
        y = vconv * x0_ref[0].astype(f32)                                 # second gate
        out = jnp.dot(y.astype(w_out_ref.dtype), w_out_ref[...],
                      preferred_element_type=f32) + b_out_ref[...]
        o_ref[0] = out.astype(o_ref.dtype)                                # lane-dense store


# ----------------------------------------------------------------------------
# Wrapper
# ----------------------------------------------------------------------------
def _stageb_vmem_bytes(T, D, DOP):
    by = 2 * 3 * (T * D * 2)                       # x0 / vg(q) / vg(s) bf16, double-buffered
    by += 2 * (2 * T * D * 4)                      # k window f32, double-buffered
    by += 2 * (T * DOP * 4)                        # output tile f32, double-buffered
    by += T * D * 4                                # acc scratch
    by += 2 * (D * 4 + D * DOP * 2 + DOP * 4)      # fbias + W_out(bf16) + b_out
    return by


def hyena_operator(u, params, *, l_max, tile=None):
    B, L, D = u.shape
    assert L == l_max and L % 8 == 0 and L >= 8
    D3 = 3 * D
    bf16, f32 = jnp.bfloat16, jnp.float32

    d_out = params["W_out"].shape[0]
    DOP = d_out if d_out % 128 == 0 else ((d_out + 127) // 128) * 128    # lane-dense output

    # VMEM budget: respects v7x's 64 MiB, uses more on v5e/v6e's 128 MiB.
    try:
        vmem_cap = int(pltpu.get_tpu_info().vmem_capacity_bytes)
    except Exception:
        vmem_cap = 64 * 1024 * 1024
    vmem_limit = min(int(0.75 * vmem_cap), 100 * 1024 * 1024)

    if tile is None:
        cands = [t for t in range(8, min(L, 1024) + 1, 8) if L % t == 0]
        tile = cands[0]
        for t in cands:
            if _stageb_vmem_bytes(t, D, DOP) <= vmem_limit // 2:
                tile = t
    T = tile
    assert T >= 8 and T % 8 == 0 and L % T == 0
    NT = L // T

    # ---- kernel-ready parameter packing (one-time layout plumbing) ----------
    w_in_t = params["W_in"].T.astype(bf16)                           # (D, 3D)
    b_in = params["b_in"].reshape(1, D3).astype(f32)
    sfw = params["conv_w"][:, 0, :].T.astype(f32)                    # (3, 3D): taps [t-2,t-1,t]
    sfb = params["conv_b"].reshape(1, D3).astype(f32)
    # k_ext[j] = k_filt[j - T]; first T rows zero -> causal masking of lag < 0.
    k_ext = jnp.concatenate([jnp.zeros((T, D), f32),
                             params["k_filt"].astype(f32)], axis=0)  # (L+T, D)
    # Overlapping 2T-row windows, one per tile offset g = q - s (O(T*D) VMEM).
    kwin = jnp.stack([k_ext[g * T:(g + 2) * T] for g in range(NT)])  # (NT, 2T, D)
    fbias = params["f_bias"].reshape(1, D).astype(f32)
    w_out_t = jnp.zeros((D, DOP), f32).at[:, :d_out].set(params["W_out"].T).astype(bf16)
    b_out = jnp.zeros((1, DOP), f32).at[:, :d_out].set(params["b_out"].reshape(1, d_out))

    u_bf = u.astype(bf16)

    # ---- stage A: in_proj + short filter + first gate ------------------------
    cost_a = pl.CostEstimate(
        flops=2 * B * NT * (T + 8) * D * D3 + 12 * B * L * D3,
        transcendentals=0,
        bytes_accessed=(B * L * D * 2 + B * NT * 8 * D * 2 + D * D3 * 2
                        + 5 * D3 * 4 + 2 * B * L * D * 2))
    x0, vg = pl.pallas_call(
        hyena_proj_kernel,
        out_shape=(jax.ShapeDtypeStruct((B, L, D), bf16),
                   jax.ShapeDtypeStruct((B, L, D), bf16)),
        grid=(B, NT),
        in_specs=[
            pl.BlockSpec((1, T, D), lambda b, i: (b, i, 0)),                 # u (cur tile)
            pl.BlockSpec((1, 8, D),                                          # 8-row halo only
                         lambda b, i: (b, jnp.maximum(i * (T // 8) - 1, 0), 0)),
            pl.BlockSpec((D, D3), lambda b, i: (0, 0)),
            pl.BlockSpec((1, D3), lambda b, i: (0, 0)),
            pl.BlockSpec((3, D3), lambda b, i: (0, 0)),
            pl.BlockSpec((1, D3), lambda b, i: (0, 0)),
        ],
        out_specs=(pl.BlockSpec((1, T, D), lambda b, i: (b, i, 0)),
                   pl.BlockSpec((1, T, D), lambda b, i: (b, i, 0))),
        compiler_params=pltpu.CompilerParams(
            dimension_semantics=("parallel", "parallel"),
            vmem_limit_bytes=vmem_limit),
        cost_estimate=cost_a,
    )(u_bf, u_bf, w_in_t, b_in, sfw, sfb)

    # ---- stage B: triangular causal long conv + bias + gate + out_proj -------
    q_idx, s_idx = [], []
    for qq in range(NT):
        for ss in range(qq + 1):
            q_idx.append(qq)
            s_idx.append(ss)
    NP = len(q_idx)                                                   # NT*(NT+1)/2
    qtab = jnp.asarray(q_idx, jnp.int32)
    stab = jnp.asarray(s_idx, jnp.int32)

    cost_b = pl.CostEstimate(
        flops=B * NP * 2 * T * T * D + B * L * (2 * D * DOP + 4 * D),
        transcendentals=0,
        bytes_accessed=(B * NP * (T * D * 2 + 2 * T * D * 4)
                        + B * L * (2 * D * 2 + DOP * 4)
                        + D * DOP * 2 + DOP * 4 + D * 4))

    grid_spec = pltpu.PrefetchScalarGridSpec(
        num_scalar_prefetch=2,
        grid=(B, NP),
        in_specs=[
            pl.BlockSpec((1, T, D), lambda b, p, qt, st: (b, qt[p], 0)),       # x0 (query)
            pl.BlockSpec((1, T, D), lambda b, p, qt, st: (b, qt[p], 0)),       # vg (query)
            pl.BlockSpec((1, T, D), lambda b, p, qt, st: (b, st[p], 0)),       # vg (source)
            pl.BlockSpec((1, 2 * T, D), lambda b, p, qt, st: (qt[p] - st[p], 0, 0)),  # k window
            pl.BlockSpec((1, D), lambda b, p, qt, st: (0, 0)),
            pl.BlockSpec((D, DOP), lambda b, p, qt, st: (0, 0)),
            pl.BlockSpec((1, DOP), lambda b, p, qt, st: (0, 0)),
        ],
        out_specs=pl.BlockSpec((1, T, DOP), lambda b, p, qt, st: (b, qt[p], 0)),
        scratch_shapes=[pltpu.VMEM((T, D), jnp.float32)],
    )
    out = pl.pallas_call(
        hyena_longconv_kernel,
        out_shape=jax.ShapeDtypeStruct((B, L, DOP), f32),
        grid_spec=grid_spec,
        compiler_params=pltpu.CompilerParams(
            dimension_semantics=("parallel", "arbitrary"),
            vmem_limit_bytes=vmem_limit),
        cost_estimate=cost_b,
    )(qtab, stab, x0, vg, vg, kwin, fbias, w_out_t, b_out)

    return out if DOP == d_out else out[..., :d_out]


# ----------------------------------------------------------------------------
# Parameter setup (deterministic, plain JAX glue)
# ----------------------------------------------------------------------------
def hyena_filter_k(hidden, w_final, d_filt, L, emb_dim):
    """Standard Hyena implicit filter: pos-emb -> sin MLP -> exp modulation."""
    t = jnp.linspace(0.0, 1.0, L)[:, None]                          # (L, 1)
    bands = (emb_dim - 1) // 2
    t_rescaled = jnp.linspace(0.0, L - 1.0, L)[:, None]
    w = 2.0 * math.pi * t_rescaled / L
    f = jnp.linspace(1e-4, float(bands - 1), bands)[None, :]
    z = jnp.concatenate([t, jnp.cos(f * w), -jnp.sin(f * w)], axis=-1)  # (L, emb_dim)
    h = z
    for (Wl, bl) in hidden:
        h = jnp.sin(h @ Wl.T + bl)
    h = h @ w_final.T                                               # (L, d_filt)
    max_decay = math.log(1e-2) / 0.3
    min_decay = math.log(1e-2) / 1.5
    deltas = jnp.linspace(min_decay, max_decay, d_filt)[None, :]
    return h * jnp.exp(-t * jnp.abs(deltas))


def init_hyena_params(key, *, d_model, l_max, d_out, order=2, filter_order=64,
                      emb_dim=3, num_inner_mlps=2):
    assert order == 2
    D = d_model
    inner = D * (order + 1)
    d_filt = D * (order - 1)                 # == D for order=2
    ks = jax.random.split(key, 12 + 2 * num_inner_mlps)

    def rn(k, shape, scale):
        return scale * jax.random.normal(k, shape, jnp.float32)

    W_in = rn(ks[0], (inner, D), 1.0 / math.sqrt(D))
    b_in = rn(ks[1], (inner,), 0.02)
    conv_w = rn(ks[2], (inner, 1, 3), 1.0 / math.sqrt(3.0))          # depthwise Conv1d weight
    conv_b = rn(ks[3], (inner,), 0.02)
    W_out = rn(ks[4], (d_out, D), 1.0 / math.sqrt(D))
    b_out = rn(ks[5], (d_out,), 0.02)
    f_bias = jax.random.normal(ks[6], (d_filt,), jnp.float32)        # HyenaFilter.bias ~ randn

    hidden = [(rn(ks[7], (filter_order, emb_dim), 1.0 / math.sqrt(emb_dim)),
               rn(ks[8], (filter_order,), 0.02))]
    for i in range(num_inner_mlps):
        hidden.append((rn(ks[9 + 2 * i], (filter_order, filter_order),
                          1.0 / math.sqrt(filter_order)),
                       rn(ks[10 + 2 * i], (filter_order,), 0.02)))
    W_final = rn(ks[9 + 2 * num_inner_mlps], (d_filt, filter_order),
                 1.0 / math.sqrt(filter_order))

    k_filt = hyena_filter_k(hidden, W_final, d_filt, l_max, emb_dim)  # (L, d_filt)

    return dict(W_in=W_in, b_in=b_in, conv_w=conv_w, conv_b=conv_b,
                W_out=W_out, b_out=b_out, f_bias=f_bias, k_filt=k_filt)


# ----------------------------------------------------------------------------
# Pure-JAX reference (FFT long conv == torch fftconv semantics).  Mirrors the
# kernel's dtype contract: bf16-in / f32-accumulate matmuls and bf16 storage of
# the stage-A outputs; the long conv, bias residual and gates stay f32, so it
# independently validates the tiled direct causal convolution.
# ----------------------------------------------------------------------------
def hyena_reference(u, p, *, l_max):
    B, L, D = u.shape
    bf16, f32 = jnp.bfloat16, jnp.float32
    z = jnp.dot(u.astype(bf16), p["W_in"].T.astype(bf16),
                preferred_element_type=f32) + p["b_in"]              # (B, L, 3D)
    z = jnp.transpose(z, (0, 2, 1))                                  # 'b l d -> b d l'

    w = p["conv_w"][:, 0, :]                                         # (3D, 3)
    zp = jnp.pad(z, ((0, 0), (0, 0), (2, 0)))
    uc = (w[:, 0][:, None] * zp[..., :L]
          + w[:, 1][:, None] * zp[..., 1:L + 1]
          + w[:, 2][:, None] * zp[..., 2:L + 2]
          + p["conv_b"][:, None])
    x0, x1, v = uc[:, :D], uc[:, D:2 * D], uc[:, 2 * D:]

    # Mirror the kernel's bf16 storage of the stage-A outputs.
    v = (v * x1).astype(bf16).astype(f32)
    x0 = x0.astype(bf16).astype(f32)

    k = p["k_filt"].T                                                # (D, L)
    n = 2 * L
    kf = jnp.fft.rfft(k, n=n) / n
    vf = jnp.fft.rfft(v, n=n)
    yv = jnp.fft.irfft(vf * kf, n=n, norm="forward")[..., :L] + v * p["f_bias"][:, None]
    y = jnp.transpose(yv * x0, (0, 2, 1))                            # (B, L, D)
    return jnp.dot(y.astype(bf16), p["W_out"].T.astype(bf16),
                   preferred_element_type=f32) + p["b_out"]


if __name__ == "__main__":
    B, D, L, D_OUT, TILE = 2, 16, 32, 16, 8

    key = jax.random.PRNGKey(0)
    k_u, k_p = jax.random.split(key)
    u = jax.random.normal(k_u, (B, L, D), jnp.float32)
    params = init_hyena_params(k_p, d_model=D, l_max=L, d_out=D_OUT)

    y = hyena_operator(u, params, l_max=L, tile=TILE)
    y = jax.block_until_ready(y)

    y_ref = hyena_reference(u, params, l_max=L)
    assert y.shape == (B, L, D_OUT)
    err = float(jnp.max(jnp.abs(y - y_ref)))
    assert jnp.allclose(y, y_ref, atol=2e-2, rtol=2e-2), err

    print("KERNEL_OK")
</pallas_src>

<mosaic_0001>
module attributes {stable_mosaic.version = 11 : i64} {
  func.func @hyena_proj_kernel(%arg0: i32, %arg1: i32, %arg2: memref<1x8x16xbf16, #tpu.memory_space<vmem>>, %arg3: memref<1x8x16xbf16, #tpu.memory_space<vmem>>, %arg4: memref<16x48xbf16, #tpu.memory_space<vmem>>, %arg5: memref<1x48xf32, #tpu.memory_space<vmem>>, %arg6: memref<3x48xf32, #tpu.memory_space<vmem>>, %arg7: memref<1x48xf32, #tpu.memory_space<vmem>>, %arg8: memref<1x8x16xbf16, #tpu.memory_space<vmem>>, %arg9: memref<1x8x16xbf16, #tpu.memory_space<vmem>>) attributes {dimension_semantics = [#tpu.dimension_semantics<parallel>, #tpu.dimension_semantics<parallel>], iteration_bounds = array<i64: 2, 4>, scalar_prefetch = 0 : i64, scratch_operands = 0 : i64, tpu.core_type = #tpu.core_type<tc>, window_params = [{transform_indices = @transform_0, window_bounds = array<i64: 1, 8, 16>}, {transform_indices = @transform_1, window_bounds = array<i64: 1, 8, 16>}, {pipeline_mode = #tpu.pipeline_mode<synchronous>, transform_indices = @transform_2, window_bounds = array<i64: 16, 48>}, {pipeline_mode = #tpu.pipeline_mode<synchronous>, transform_indices = @transform_3, window_bounds = array<i64: 1, 48>}, {pipeline_mode = #tpu.pipeline_mode<synchronous>, transform_indices = @transform_4, window_bounds = array<i64: 3, 48>}, {pipeline_mode = #tpu.pipeline_mode<synchronous>, transform_indices = @transform_5, window_bounds = array<i64: 1, 48>}, {transform_indices = @transform_6, window_bounds = array<i64: 1, 8, 16>}, {transform_indices = @transform_7, window_bounds = array<i64: 1, 8, 16>}]} {
    %c0 = arith.constant 0 : index
    %c0_0 = arith.constant 0 : index
    %0 = vector.load %arg4[%c0, %c0_0] : memref<16x48xbf16, #tpu.memory_space<vmem>>, vector<16x48xbf16>
    %c0_1 = arith.constant 0 : index
    %c0_2 = arith.constant 0 : index
    %1 = vector.load %arg5[%c0_1, %c0_2] : memref<1x48xf32, #tpu.memory_space<vmem>>, vector<1x48xf32>
    %c0_3 = arith.constant 0 : index
    %c0_4 = arith.constant 0 : index
    %c0_5 = arith.constant 0 : index
    %2 = vector.load %arg2[%c0_3, %c0_4, %c0_5] : memref<1x8x16xbf16, #tpu.memory_space<vmem>>, vector<1x8x16xbf16>
    %3 = vector.shape_cast %2 : vector<1x8x16xbf16> to vector<8x16xbf16>
    %cst = arith.constant dense<0.000000e+00> : vector<8x48xf32>
    %4 = tpu.matmul %3, %0, %cst {dimension_numbers = #tpu.dot_dimension_numbers<[1], [0], [0], [1], [0, 0, 1, 1], [], []>} : vector<8x16xbf16>, vector<16x48xbf16>, vector<8x48xf32> -> vector<8x48xf32>
    %5 = vector.broadcast %1 : vector<1x48xf32> to vector<8x48xf32>
    %6 = arith.addf %4, %5 : vector<8x48xf32>
    %c0_6 = arith.constant 0 : index
    %c0_7 = arith.constant 0 : index
    %c0_8 = arith.constant 0 : index
    %7 = vector.load %arg3[%c0_6, %c0_7, %c0_8] : memref<1x8x16xbf16, #tpu.memory_space<vmem>>, vector<1x8x16xbf16>
    %8 = vector.shape_cast %7 : vector<1x8x16xbf16> to vector<8x16xbf16>
    %cst_9 = arith.constant dense<0.000000e+00> : vector<8x48xf32>
    %9 = tpu.matmul %8, %0, %cst_9 {dimension_numbers = #tpu.dot_dimension_numbers<[1], [0], [0], [1], [0, 0, 1, 1], [], []>} : vector<8x16xbf16>, vector<16x48xbf16>, vector<8x48xf32> -> vector<8x48xf32>
    %10 = vector.broadcast %1 : vector<1x48xf32> to vector<8x48xf32>
    %11 = arith.addf %9, %10 : vector<8x48xf32>
    %c0_i32 = arith.constant 0 : i32
    %12 = arith.cmpi sgt, %arg1, %c0_i32 : i32
    %13 = arith.extui %12 : i1 to i32
    %14 = arith.sitofp %13 : i32 to f32
    %15 = vector.broadcast %14 : f32 to vector<8x48xf32>
    %16 = arith.mulf %11, %15 : vector<8x48xf32>
    %17 = tpu.concatenate %16, %6 in 0 : vector<8x48xf32>, vector<8x48xf32> -> vector<16x48xf32>
    %18 = vector.extract_strided_slice %17 {offsets = [6, 0], sizes = [8, 48], strides = [1, 1]} : vector<16x48xf32> to vector<8x48xf32>
    %19 = vector.extract_strided_slice %17 {offsets = [7, 0], sizes = [8, 48], strides = [1, 1]} : vector<16x48xf32> to vector<8x48xf32>
    %c0_10 = arith.constant 0 : index
    %c0_11 = arith.constant 0 : index
    %20 = vector.load %arg6[%c0_10, %c0_11] : memref<3x48xf32, #tpu.memory_space<vmem>>, vector<1x48xf32>
    %21 = vector.broadcast %20 : vector<1x48xf32> to vector<8x48xf32>
    %22 = arith.mulf %21, %18 : vector<8x48xf32>
    %c1 = arith.constant 1 : index
    %c0_12 = arith.constant 0 : index
    %23 = vector.load %arg6[%c1, %c0_12] : memref<3x48xf32, #tpu.memory_space<vmem>>, vector<1x48xf32>
    %24 = vector.broadcast %23 : vector<1x48xf32> to vector<8x48xf32>
    %25 = arith.mulf %24, %19 : vector<8x48xf32>
    %26 = arith.addf %22, %25 : vector<8x48xf32>
    %c2 = arith.constant 2 : index
    %c0_13 = arith.constant 0 : index
    %27 = vector.load %arg6[%c2, %c0_13] : memref<3x48xf32, #tpu.memory_space<vmem>>, vector<1x48xf32>
    %28 = vector.broadcast %27 : vector<1x48xf32> to vector<8x48xf32>
    %29 = arith.mulf %28, %6 : vector<8x48xf32>
    %30 = arith.addf %26, %29 : vector<8x48xf32>
    %c0_14 = arith.constant 0 : index
    %c0_15 = arith.constant 0 : index
    %31 = vector.load %arg7[%c0_14, %c0_15] : memref<1x48xf32, #tpu.memory_space<vmem>>, vector<1x48xf32>
    %32 = vector.broadcast %31 : vector<1x48xf32> to vector<8x48xf32>
    %33 = arith.addf %30, %32 : vector<8x48xf32>
    %34 = vector.extract_strided_slice %33 {offsets = [0, 0], sizes = [8, 16], strides = [1, 1]} : vector<8x48xf32> to vector<8x16xf32>
    %35 = vector.extract_strided_slice %33 {offsets = [0, 16], sizes = [8, 16], strides = [1, 1]} : vector<8x48xf32> to vector<8x16xf32>
    %36 = vector.extract_strided_slice %33 {offsets = [0, 32], sizes = [8, 16], strides = [1, 1]} : vector<8x48xf32> to vector<8x16xf32>
    %37 = arith.truncf %34 : vector<8x16xf32> to vector<8x16xbf16>
    %c0_16 = arith.constant 0 : index
    %c0_17 = arith.constant 0 : index
    %c0_18 = arith.constant 0 : index
    %38 = vector.load %arg8[%c0_16, %c0_17, %c0_18] : memref<1x8x16xbf16, #tpu.memory_space<vmem>>, vector<1x8x16xbf16>
    %39 = vector.shape_cast %38 : vector<1x8x16xbf16> to vector<8x16xbf16>
    %40 = vector.shape_cast %37 : vector<8x16xbf16> to vector<1x8x16xbf16>
    tpu.vector_store %arg8[%c0_16, %c0_17, %c0_18], %40 {strides = array<i32>} : memref<1x8x16xbf16, #tpu.memory_space<vmem>>, vector<1x8x16xbf16>,
    %41 = arith.mulf %36, %35 : vector<8x16xf32>
    %42 = arith.truncf %41 : vector<8x16xf32> to vector<8x16xbf16>
    %c0_19 = arith.constant 0 : index
    %c0_20 = arith.constant 0 : index
    %c0_21 = arith.constant 0 : index
    %43 = vector.load %arg9[%c0_19, %c0_20, %c0_21] : memref<1x8x16xbf16, #tpu.memory_space<vmem>>, vector<1x8x16xbf16>
    %44 = vector.shape_cast %43 : vector<1x8x16xbf16> to vector<8x16xbf16>
    %45 = vector.shape_cast %42 : vector<8x16xbf16> to vector<1x8x16xbf16>
    tpu.vector_store %arg9[%c0_19, %c0_20, %c0_21], %45 {strides = array<i32>} : memref<1x8x16xbf16, #tpu.memory_space<vmem>>, vector<1x8x16xbf16>,
    return
  }
  func.func @transform_0(%arg0: i32, %arg1: i32) -> (i32, i32, i32) {
    %c0_i32 = arith.constant 0 : i32
    %c0_i32_0 = arith.constant 0 : i32
    return %arg0, %arg1, %c0_i32 : i32, i32, i32
  }
  func.func @transform_1(%arg0: i32, %arg1: i32) -> (i32, i32, i32) {
    %c1_i32 = arith.constant 1 : i32
    %0 = arith.muli %arg1, %c1_i32 : i32
    %c1_i32_0 = arith.constant 1 : i32
    %1 = arith.subi %0, %c1_i32_0 : i32
    %c0_i32 = arith.constant 0 : i32
    %2 = arith.maxsi %1, %c0_i32 : i32
    %c0_i32_1 = arith.constant 0 : i32
    %c0_i32_2 = arith.constant 0 : i32
    return %arg0, %2, %c0_i32_1 : i32, i32, i32
  }
  func.func @transform_2(%arg0: i32, %arg1: i32) -> (i32, i32) {
    %c0_i32 = arith.constant 0 : i32
    %c0_i32_0 = arith.constant 0 : i32
    %c0_i32_1 = arith.constant 0 : i32
    return %c0_i32, %c0_i32_0 : i32, i32
  }
  func.func @transform_3(%arg0: i32, %arg1: i32) -> (i32, i32) {
    %c0_i32 = arith.constant 0 : i32
    %c0_i32_0 = arith.constant 0 : i32
    %c0_i32_1 = arith.constant 0 : i32
    return %c0_i32, %c0_i32_0 : i32, i32
  }
  func.func @transform_4(%arg0: i32, %arg1: i32) -> (i32, i32) {
    %c0_i32 = arith.constant 0 : i32
    %c0_i32_0 = arith.constant 0 : i32
    %c0_i32_1 = arith.constant 0 : i32
    return %c0_i32, %c0_i32_0 : i32, i32
  }
  func.func @transform_5(%arg0: i32, %arg1: i32) -> (i32, i32) {
    %c0_i32 = arith.constant 0 : i32
    %c0_i32_0 = arith.constant 0 : i32
    %c0_i32_1 = arith.constant 0 : i32
    return %c0_i32, %c0_i32_0 : i32, i32
  }
  func.func @transform_6(%arg0: i32, %arg1: i32) -> (i32, i32, i32) {
    %c0_i32 = arith.constant 0 : i32
    %c0_i32_0 = arith.constant 0 : i32
    return %arg0, %arg1, %c0_i32 : i32, i32, i32
  }
  func.func @transform_7(%arg0: i32, %arg1: i32) -> (i32, i32, i32) {
    %c0_i32 = arith.constant 0 : i32
    %c0_i32_0 = arith.constant 0 : i32
    return %arg0, %arg1, %c0_i32 : i32, i32, i32
  }
}

</mosaic_0001>

<llo_original>
// kernel: tpu_custom_call.1
$region0: #{tpu_custom_call.1}
  #allocation0 [shape = 'u32[]', space=smem, size = 0x4, offset = 0x4, fixed_abs, tag = 'smem constant byte address 0x4 - core index']
  #allocation1 [shape = 'u32[144,128]{1,0:T(1,128)}', space=vmem, size = 0x12000, scoped, tag = 'internal scratch']
  %s0 = inlined_call_operand.vmem [shape: bf16[2,32,16], index: 0, kind: input, shape index: {}]
  %s1 = inlined_call_operand.vmem [shape: bf16[2,32,16], index: 1, kind: input, shape index: {}]
  %s2 = inlined_call_operand.vmem [shape: bf16[16,48], index: 2, kind: input, shape index: {}]
  %s3 = inlined_call_operand.vmem [shape: f32[1,48], index: 3, kind: input, shape index: {}]
  %s4 = inlined_call_operand.vmem [shape: f32[3,48], index: 4, kind: input, shape index: {}]
  %s5 = inlined_call_operand.vmem [shape: f32[1,48], index: 5, kind: input, shape index: {}]
  %s6 = inlined_call_operand.vmem [shape: bf16[2,32,16], index: 6, kind: output, shape index: {0}]
  %s7 = inlined_call_operand.vmem [shape: bf16[2,32,16], index: 7, kind: output, shape index: {1}]
  %8 = xla_tuple %s6, %s7
  %s9 = sld [smem:[#allocation0]]
  $region65: #{tpu_custom_call.1} parent=0
    _
  %s11 = ssub.s32 1, %s9
  %s12 = scalar_select 0, %s11, %s9
  loop: start=0, step=1, limit=10
  $region2: #{tpu_custom_call.1} parent=0 // loop_pre_header
    _
  $region3: #{tpu_custom_call.1} parent=0 // loop_header
    %s14 = sphi 0, %s18
    %p15 = scmp.ge.s32.totalorder %s14, 10
    %s21 = sphi 0, %s33
    %s22 = sphi 0, %s29
    %s23 = sphi 0, %s21
    %s24 = sphi 0, %s22
    %s25 = sphi 0, %s23
    %s26 = sphi 0, %s24
    %s38 = sphi 0, %s40
    %s41 = sphi 0, %s38
    %s42 = sphi 0, %s41
    %s58 = sphi 0, %s42
    %s72 = sphi 0, %s74
    %s75 = sphi 0, %s72
    %s76 = sphi 0, %s75
    %s92 = sphi 0, %s76
    %s96 = sphi 0, %s96
    %s98 = sphi 0, %s96
    %s99 = sphi 0, %s98
    %s113 = sphi 0, %s99
    %s117 = sphi 0, %s117
    %s119 = sphi 0, %s117
    %s120 = sphi 0, %s119
    %s134 = sphi 0, %s120
    %s138 = sphi 0, %s138
    %s140 = sphi 0, %s138
    %s141 = sphi 0, %s140
    %s155 = sphi 0, %s141
    %s159 = sphi 0, %s159
    %s161 = sphi 0, %s159
    %s162 = sphi 0, %s161
    %s176 = sphi 0, %s162
    %s184 = sphi 0, %s186
    %s187 = sphi 0, %s184
    %s188 = sphi 0, %s187
    %s204 = sphi 0, %s188
    %s212 = sphi 0, %s214
    %s215 = sphi 0, %s212
    %s216 = sphi 0, %s215
    %s232 = sphi 0, %s216
  $region4: #{tpu_custom_call.1} parent=0 // loop_header_branch
    %17 = sbr.rel (%p15) target = $region8
  $region5: #{tpu_custom_call.1} parent=0 // loop_body
    %s19 = ssub.s32 %s14, 1
    %s20 = ssub.s32 %s14, 2
    %s27 = sadd.s32 1, %s22
    %p28 = scmp.ge.s32.totalorder %s27, 4
    %s29 = scalar_select %p28, 0, %s27
    %s30 = sadd.s32 1, %s21
    %s31 = scalar_select %p28, %s30, %s21
    %p32 = scmp.ge.s32.totalorder %s31, 2
    %s33 = scalar_select %p32, 0, %s31
    %s34 = ssub.s32 %s21, %s33
    %s35 = ssub.s32 %s22, %s29
    %s36 = sor.u32 %s34, %s35
    %p37 = scmp.eq.s32.totalorder %s36, 0
    %s39 = sadd.s32 %s38, 1
    %s40 = scalar_select %p37, %s38, %s39
    %p43 = pneg %p37
    %p44 = scmp.eq.s32.totalorder %s14, 7
    %p45 = por %p43, %p44
    %p46 = scmp.ne.s32.totalorder %s38, %s41
    %p47 = scmp.eq.s32.totalorder %s14, 0
    %p48 = por %p46, %p47
    %p49 = scmp.ne.s32.totalorder %s38, %s41
    %p50 = scmp.eq.s32.totalorder %s19, 7
    %p51 = por %p49, %p50
    %p52 = scmp.ne.s32.totalorder %s41, %s42
    %p53 = scmp.eq.s32.totalorder %s19, 0
    %p54 = por %p52, %p53
    %p55 = scmp.ne.s32.totalorder %s41, %s42
    %p56 = scmp.eq.s32.totalorder %s20, 7
    %p57 = por %p55, %p56
    %p59 = scmp.ne.s32.totalorder %s42, %s58
    %p60 = scmp.eq.s32.totalorder %s20, 0
    %p61 = por %p59, %p60
    %s62 = ssub.s32 %s22, 1
    %p63 = scmp.gt.s32.totalorder %s62, 0
    %s64 = scalar_select %p63, %s62, 0
    %s65 = ssub.s32 %s29, 1
    %p66 = scmp.gt.s32.totalorder %s65, 0
    %s67 = scalar_select %p66, %s65, 0
    %s68 = ssub.s32 %s21, %s33
    %s69 = ssub.s32 %s64, %s67
    %s70 = sor.u32 %s68, %s69
    %p71 = scmp.eq.s32.totalorder %s70, 0
    %s73 = sadd.s32 %s72, 1
    %s74 = scalar_select %p71, %s72, %s73
    %p77 = pneg %p71
    %p78 = scmp.eq.s32.totalorder %s14, 7
    %p79 = por %p77, %p78
    %p80 = scmp.ne.s32.totalorder %s72, %s75
    %p81 = scmp.eq.s32.totalorder %s14, 0
    %p82 = por %p80, %p81
    %p83 = scmp.ne.s32.totalorder %s72, %s75
    %p84 = scmp.eq.s32.totalorder %s19, 7
    %p85 = por %p83, %p84
    %p86 = scmp.ne.s32.totalorder %s75, %s76
    %p87 = scmp.eq.s32.totalorder %s19, 0
    %p88 = por %p86, %p87
    %p89 = scmp.ne.s32.totalorder %s75, %s76
    %p90 = scmp.eq.s32.totalorder %s20, 7
    %p91 = por %p89, %p90
    %p93 = scmp.ne.s32.totalorder %s76, %s92
    %p94 = scmp.eq.s32.totalorder %s20, 0
    %p95 = por %p93, %p94
    %s97 = sadd.s32 %s96, 1
    %p100 = scmp.eq.s32.totalorder %s14, 7
    %p101 = scmp.ne.s32.totalorder %s96, %s98
    %p102 = scmp.eq.s32.totalorder %s14, 0
    %p103 = por %p101, %p102
    %p104 = scmp.ne.s32.totalorder %s96, %s98
    %p105 = scmp.eq.s32.totalorder %s19, 7
    %p106 = por %p104, %p105
    %p107 = scmp.ne.s32.totalorder %s98, %s99
    %p108 = scmp.eq.s32.totalorder %s19, 0
    %p109 = por %p107, %p108
    %p110 = scmp.ne.s32.totalorder %s98, %s99
    %p111 = scmp.eq.s32.totalorder %s20, 7
    %p112 = por %p110, %p111
    %p114 = scmp.ne.s32.totalorder %s99, %s113
    %p115 = scmp.eq.s32.totalorder %s20, 0
    %p116 = por %p114, %p115
    %s118 = sadd.s32 %s117, 1
    %p121 = scmp.eq.s32.totalorder %s14, 7
    %p122 = scmp.ne.s32.totalorder %s117, %s119
    %p123 = scmp.eq.s32.totalorder %s14, 0
    %p124 = por %p122, %p123
    %p125 = scmp.ne.s32.totalorder %s117, %s119
    %p126 = scmp.eq.s32.totalorder %s19, 7
    %p127 = por %p125, %p126
    %p128 = scmp.ne.s32.totalorder %s119, %s120
    %p129 = scmp.eq.s32.totalorder %s19, 0
    %p130 = por %p128, %p129
    %p131 = scmp.ne.s32.totalorder %s119, %s120
    %p132 = scmp.eq.s32.totalorder %s20, 7
    %p133 = por %p131, %p132
    %p135 = scmp.ne.s32.totalorder %s120, %s134
    %p136 = scmp.eq.s32.totalorder %s20, 0
    %p137 = por %p135, %p136
    %s139 = sadd.s32 %s138, 1
    %p142 = scmp.eq.s32.totalorder %s14, 7
    %p143 = scmp.ne.s32.totalorder %s138, %s140
    %p144 = scmp.eq.s32.totalorder %s14, 0
    %p145 = por %p143, %p144
    %p146 = scmp.ne.s32.totalorder %s138, %s140
    %p147 = scmp.eq.s32.totalorder %s19, 7
    %p148 = por %p146, %p147
    %p149 = scmp.ne.s32.totalorder %s140, %s141
    %p150 = scmp.eq.s32.totalorder %s19, 0
    %p151 = por %p149, %p150
    %p152 = scmp.ne.s32.totalorder %s140, %s141
    %p153 = scmp.eq.s32.totalorder %s20, 7
    %p154 = por %p152, %p153
    %p156 = scmp.ne.s32.totalorder %s141, %s155
    %p157 = scmp.eq.s32.totalorder %s20, 0
    %p158 = por %p156, %p157
    %s160 = sadd.s32 %s159, 1
    %p163 = scmp.eq.s32.totalorder %s14, 7
    %p164 = scmp.ne.s32.totalorder %s159, %s161
    %p165 = scmp.eq.s32.totalorder %s14, 0
    %p166 = por %p164, %p165
    %p167 = scmp.ne.s32.totalorder %s159, %s161
    %p168 = scmp.eq.s32.totalorder %s19, 7
    %p169 = por %p167, %p168
    %p170 = scmp.ne.s32.totalorder %s161, %s162
    %p171 = scmp.eq.s32.totalorder %s19, 0
    %p172 = por %p170, %p171
    %p173 = scmp.ne.s32.totalorder %s161, %s162
    %p174 = scmp.eq.s32.totalorder %s20, 7
    %p175 = por %p173, %p174
    %p177 = scmp.ne.s32.totalorder %s162, %s176
    %p178 = scmp.eq.s32.totalorder %s20, 0
    %p179 = por %p177, %p178
    %s180 = ssub.s32 %s21, %s33
    %s181 = ssub.s32 %s22, %s29
    %s182 = sor.u32 %s180, %s181
    %p183 = scmp.eq.s32.totalorder %s182, 0
    %s185 = sadd.s32 %s184, 1
    %s186 = scalar_select %p183, %s184, %s185
    %p189 = pneg %p183
    %p190 = scmp.eq.s32.totalorder %s14, 7
    %p191 = por %p189, %p190
    %p192 = scmp.ne.s32.totalorder %s184, %s187
    %p193 = scmp.eq.s32.totalorder %s14, 0
    %p194 = por %p192, %p193
    %p195 = scmp.ne.s32.totalorder %s184, %s187
    %p196 = scmp.eq.s32.totalorder %s19, 7
    %p197 = por %p195, %p196
    %p198 = scmp.ne.s32.totalorder %s187, %s188
    %p199 = scmp.eq.s32.totalorder %s19, 0
    %p200 = por %p198, %p199
    %p201 = scmp.ne.s32.totalorder %s187, %s188
    %p202 = scmp.eq.s32.totalorder %s20, 7
    %p203 = por %p201, %p202
    %p205 = scmp.ne.s32.totalorder %s188, %s204
    %p206 = scmp.eq.s32.totalorder %s20, 0
    %p207 = por %p205, %p206
    %s208 = ssub.s32 %s21, %s33
    %s209 = ssub.s32 %s22, %s29
    %s210 = sor.u32 %s208, %s209
    %p211 = scmp.eq.s32.totalorder %s210, 0
    %s213 = sadd.s32 %s212, 1
    %s214 = scalar_select %p211, %s212, %s213
    %p217 = pneg %p211
    %p218 = scmp.eq.s32.totalorder %s14, 7
    %p219 = por %p217, %p218
    %p220 = scmp.ne.s32.totalorder %s212, %s215
    %p221 = scmp.eq.s32.totalorder %s14, 0
    %p222 = por %p220, %p221
    %p223 = scmp.ne.s32.totalorder %s212, %s215
    %p224 = scmp.eq.s32.totalorder %s19, 7
    %p225 = por %p223, %p224
    %p226 = scmp.ne.s32.totalorder %s215, %s216
    %p227 = scmp.eq.s32.totalorder %s19, 0
    %p228 = por %p226, %p227
    %p229 = scmp.ne.s32.totalorder %s215, %s216
    %p230 = scmp.eq.s32.totalorder %s20, 7
    %p231 = por %p229, %p230
    %p233 = scmp.ne.s32.totalorder %s216, %s232
    %p234 = scmp.eq.s32.totalorder %s20, 0
    %p235 = por %p233, %p234
    %p236 = scmp.le.s32.totalorder 1, %s14
    %p237 = scmp.lt.s32.totalorder %s14, 9
    %p238 = pnand %p236, %p237
    %p239 = pneg %p238
    // Predicated region
    $region9: #{tpu_custom_call.1} parent=5 // pred_check
      _
    $region10: #{tpu_custom_call.1} parent=5 // pred_check_branch
      %241 = sbr.rel (%p238) target = $region12
    $region11: #{tpu_custom_call.1} parent=5 // pred_region
      %s242 = ssub.s32 %s14, 1
      // Predicated region
      $region13: #{tpu_custom_call.1} parent=11 // pred_check
        %p243 = pneg %p109
      $region14: #{tpu_custom_call.1} parent=11 // pred_check_branch
        %245 = sbr.rel (%p243) target = $region16
      $region15: #{tpu_custom_call.1} parent=11 // pred_region
        _
      $region16: #{tpu_custom_call.1} parent=11 // pred_fallthru
        _
      // Predicated region
      $region17: #{tpu_custom_call.1} parent=11 // pred_check
        %p246 = pneg %p130
      $region18: #{tpu_custom_call.1} parent=11 // pred_check_branch
        %248 = sbr.rel (%p246) target = $region20
      $region19: #{tpu_custom_call.1} parent=11 // pred_region
        _
      $region20: #{tpu_custom_call.1} parent=11 // pred_fallthru
        _
      // Predicated region
      $region21: #{tpu_custom_call.1} parent=11 // pred_check
        %p249 = pneg %p151
      $region22: #{tpu_custom_call.1} parent=11 // pred_check_branch
        %251 = sbr.rel (%p249) target = $region24
      $region23: #{tpu_custom_call.1} parent=11 // pred_region
        _
      $region24: #{tpu_custom_call.1} parent=11 // pred_fallthru
        _
      // Predicated region
      $region25: #{tpu_custom_call.1} parent=11 // pred_check
        %p252 = pneg %p172
      $region26: #{tpu_custom_call.1} parent=11 // pred_check_branch
        %254 = sbr.rel (%p252) target = $region28
      $region27: #{tpu_custom_call.1} parent=11 // pred_region
        _
      $region28: #{tpu_custom_call.1} parent=11 // pred_fallthru
        _
    $region12: #{tpu_custom_call.1} parent=5 // pred_fallthru
      _
    %p255 = scmp.lt.s32.totalorder %s14, 8
    // Predicated region
    $region29: #{tpu_custom_call.1} parent=5 // pred_check
      %p256 = pneg %p255
    $region30: #{tpu_custom_call.1} parent=5 // pred_check_branch
      %258 = sbr.rel (%p256) target = $region32
    $region31: #{tpu_custom_call.1} parent=5 // pred_region
      // Predicated region
      $region33: #{tpu_custom_call.1} parent=31 // pred_check
        %p259 = pneg %p48
      $region34: #{tpu_custom_call.1} parent=31 // pred_check_branch
        %261 = sbr.rel (%p259) target = $region36
      $region35: #{tpu_custom_call.1} parent=31 // pred_region
        %p262 = scmp.lt.s32.totalorder %s21, 1
        %s263 = scalar_select %p262, %s21, 1
        %p264 = scmp.lt.s32.totalorder %s22, 3
        %s265 = scalar_select %p264, %s22, 3
        %s266 = smul.addr %s263, 4
        %s267 = sadd.s32 %s265, %s266
        %s268 = smul.addr %s267, 4
        %s269 = scalar_lea.vmem %s0, %s268
      $region36: #{tpu_custom_call.1} parent=31 // pred_fallthru
        _
      // Predicated region
      $region37: #{tpu_custom_call.1} parent=31 // pred_check
        %p270 = pneg %p82
      $region38: #{tpu_custom_call.1} parent=31 // pred_check_branch
        %272 = sbr.rel (%p270) target = $region40
      $region39: #{tpu_custom_call.1} parent=31 // pred_region
        %s273 = ssub.s32 %s22, 1
        %p274 = scmp.gt.s32.totalorder %s273, 0
        %s275 = scalar_select %p274, %s273, 0
        %p276 = scmp.lt.s32.totalorder %s21, 1
        %s277 = scalar_select %p276, %s21, 1
        %p278 = scmp.lt.s32.totalorder %s275, 3
        %s279 = scalar_select %p278, %s275, 3
        %s280 = smul.addr %s277, 4
        %s281 = sadd.s32 %s279, %s280
        %s282 = smul.addr %s281, 4
        %s283 = scalar_lea.vmem %s1, %s282
        %s284 = ssub.s32 %s22, 1
        %p285 = scmp.gt.s32.totalorder %s284, 0
        %s286 = scalar_select %p285, %s284, 0
      $region40: #{tpu_custom_call.1} parent=31 // pred_fallthru
        _
    $region32: #{tpu_custom_call.1} parent=5 // pred_fallthru
      _
    %p287 = scmp.le.s32.totalorder 1, %s14
    %p288 = scmp.lt.s32.totalorder %s14, 9
    %p289 = pnand %p287, %p288
    %p290 = pneg %p289
    // Predicated region
    $region41: #{tpu_custom_call.1} parent=5 // pred_check
      _
    $region42: #{tpu_custom_call.1} parent=5 // pred_check_branch
      %292 = sbr.rel (%p289) target = $region44
    $region43: #{tpu_custom_call.1} parent=5 // pred_region
      %s293 = ssub.s32 %s14, 1
      %p294 = scmp.lt.s32.totalorder %s23, 1
      %s295 = scalar_select %p294, %s23, 1
      %p296 = scmp.lt.s32.totalorder %s24, 3
      %s297 = scalar_select %p296, %s24, 3
      %s298 = smul.addr %s295, 4
      %s299 = sadd.s32 %s297, %s298
      %s300 = smul.addr %s299, 4
      %s301 = scalar_lea.vmem %s0, %s300
      %p302 = pneg %p54
      %p303 = pneg %p51
      %s304 = ssub.s32 %s24, 1
      %p305 = scmp.gt.s32.totalorder %s304, 0
      %s306 = scalar_select %p305, %s304, 0
      %p307 = scmp.lt.s32.totalorder %s23, 1
      %s308 = scalar_select %p307, %s23, 1
      %p309 = scmp.lt.s32.totalorder %s306, 3
      %s310 = scalar_select %p309, %s306, 3
      %s311 = smul.addr %s308, 4
      %s312 = sadd.s32 %s310, %s311
      %s313 = smul.addr %s312, 4
      %s314 = scalar_lea.vmem %s1, %s313
      %p315 = pneg %p88
      %p316 = pneg %p85
      %p317 = pneg %p109
      %p318 = pneg %p106
      %p319 = pneg %p130
      %p320 = pneg %p127
      %p321 = pneg %p151
      %p322 = pneg %p148
      %p323 = pneg %p172
      %p324 = pneg %p169
      %p325 = pneg %p200
      %p326 = pneg %p197
      %p327 = scmp.lt.s32.totalorder %s23, 1
      %s328 = scalar_select %p327, %s23, 1
      %p329 = scmp.lt.s32.totalorder %s24, 3
      %s330 = scalar_select %p329, %s24, 3
      %s331 = smul.addr %s328, 4
      %s332 = sadd.s32 %s330, %s331
      %s333 = smul.addr %s332, 4
      %s334 = scalar_lea.vmem %s6, %s333
      %p335 = pneg %p228
      %p336 = pneg %p225
      %p337 = scmp.lt.s32.totalorder %s23, 1
      %s338 = scalar_select %p337, %s23, 1
      %p339 = scmp.lt.s32.totalorder %s24, 3
      %s340 = scalar_select %p339, %s24, 3
      %s341 = smul.addr %s338, 4
      %s342 = sadd.s32 %s340, %s341
      %s343 = smul.addr %s342, 4
      %s344 = scalar_lea.vmem %s7, %s343
      %p345 = scmp.lt.s32.totalorder %s23, 1
      %s346 = scalar_select %p345, %s23, 1
      %p347 = scmp.lt.s32.totalorder %s24, 3
      %s348 = scalar_select %p347, %s24, 3
      %s349 = smul.addr %s346, 4
      %s350 = sadd.s32 %s348, %s349
      %s351 = smul.addr %s350, 4
      %s352 = scalar_lea.vmem %s0, %s351
      %s353 = ssub.s32 %s24, 1
      %p354 = scmp.gt.s32.totalorder %s353, 0
      %s355 = scalar_select %p354, %s353, 0
      %p356 = scmp.lt.s32.totalorder %s23, 1
      %s357 = scalar_select %p356, %s23, 1
      %p358 = scmp.lt.s32.totalorder %s355, 3
      %s359 = scalar_select %p358, %s355, 3
      %s360 = smul.addr %s357, 4
      %s361 = sadd.s32 %s359, %s360
      %s362 = smul.addr %s361, 4
      %s363 = scalar_lea.vmem %s1, %s362
      %s364 = ssub.s32 %s24, 1
      %p365 = scmp.gt.s32.totalorder %s364, 0
      %s366 = scalar_select %p365, %s364, 0
      %p367 = scmp.lt.s32.totalorder %s23, 1
      %s368 = scalar_select %p367, %s23, 1
      %p369 = scmp.lt.s32.totalorder %s24, 3
      %s370 = scalar_select %p369, %s24, 3
      %s371 = smul.addr %s368, 4
      %s372 = sadd.s32 %s370, %s371
      %s373 = smul.addr %s372, 4
      %s374 = scalar_lea.vmem %s6, %s373
      %p375 = scmp.lt.s32.totalorder %s23, 1
      %s376 = scalar_select %p375, %s23, 1
      %p377 = scmp.lt.s32.totalorder %s24, 3
      %s378 = scalar_select %p377, %s24, 3
      %s379 = smul.addr %s376, 4
      %s380 = sadd.s32 %s378, %s379
      %s381 = smul.addr %s380, 4
      %s382 = scalar_lea.vmem %s7, %s381
      %v384 = vld [vmem:[%s2] sm:$0xf]
      %v385 = vld [vmem:[%s2 + $0x4] sm:$0xf]
      %v386 = vld [vmem:[%s3] sm:$0x1]
      %v387 = vld [vmem:[%s352] sm:$0xf]
      %v389 = vlaneseq
      %v390 = vshrl.u32 %v389, 7
      %v391 = vsub.s32 0, %v390
      %v392 = vrot.slane %v386, %v391
      %v396 = vunpack.c.l.b16 %v384
      %v397 = vunpack.c.l.b16 %v385
      %v398 = vpack.c.b16 %v397, %v396
      %vm400 = vcmask 130048
      %v402 = vsel %vm400, %v387, 0
      %404 = vmatprep.subr.bf16.mxu0 0
      %405 = vmatpush1.bf16.msra.mxu0 0
      %406 = vmatprep.subr.bf16.mxu0 0
      %407 = vmatpush1.bf16.msra.mxu0 0
      %408 = vmatprep.subr.bf16.mxu0 0
      %409 = vmatpush1.bf16.msra.mxu0 0
      %410 = vmatprep.subr.bf16.mxu0 0
      %411 = vmatpush1.bf16.msra.mxu0 0
      %412 = vmatprep.subr.bf16.mxu0 0
      %413 = vmatpush1.bf16.msra.mxu0 0
      %414 = vmatprep.subr.bf16.mxu0 0
      %415 = vmatpush1.bf16.msra.mxu0 0
      %416 = vmatprep.subr.bf16.mxu0 0
      %417 = vmatpush1.bf16.msra.mxu0 0
      %418 = vmatprep.subr.bf16.mxu0 0
      %419 = vmatpush1.bf16.msra.mxu0 %v398
      %420 = vmatprep.subr.bf16.mxu0 0
      %421 = vmatpush2.bf16.msra.mxu0 0
      %422 = vmatprep.subr.bf16.mxu0 0
      %423 = vmatpush2.bf16.msra.mxu0 0
      %424 = vmatprep.subr.bf16.mxu0 0
      %425 = vmatpush2.bf16.msra.mxu0 0
      %426 = vmatprep.subr.bf16.mxu0 0
      %427 = vmatpush2.bf16.msra.mxu0 0
      %428 = vmatprep.subr.bf16.mxu0 0
      %429 = vmatpush2.bf16.msra.mxu0 0
      %430 = vmatprep.subr.bf16.mxu0 0
      %431 = vmatpush2.bf16.msra.mxu0 0
      %432 = vmatprep.subr.bf16.mxu0 0
      %433 = vmatpush2.bf16.msra.mxu0 0
      %434 = vmatprep.subr.bf16.mxu0 0
      %435 = vmatpush2.bf16.msra.mxu0 0
      %436 = vmatprep.mubr.bf16.mxu0 0
      %437 = vmatmul.mubr.bf16.gmra.mxu0 %v402
      %v438 = vpop.f32.mrf.mxu0
      %v439 = vadd.f32 %v392, %v438
      %v440 = vpop.f32.mrf.mxu0
      %v441 = vpop.f32.mrf.mxu0
      %v442 = vpop.f32.mrf.mxu0
      %443 = vdwg.mxu0
      %v444 = vld [vmem:[%s363] sm:$0xf]
      %v446 = vsel %vm400, %v444, 0
      %448 = vmatprep.subr.bf16.mxu0 0
      %449 = vmatpush1.bf16.msra.mxu0 0
      %450 = vmatprep.subr.bf16.mxu0 0
      %451 = vmatpush1.bf16.msra.mxu0 0
      %452 = vmatprep.subr.bf16.mxu0 0
      %453 = vmatpush1.bf16.msra.mxu0 0
      %454 = vmatprep.subr.bf16.mxu0 0
      %455 = vmatpush1.bf16.msra.mxu0 0
      %456 = vmatprep.subr.bf16.mxu0 0
      %457 = vmatpush1.bf16.msra.mxu0 0
      %458 = vmatprep.subr.bf16.mxu0 0
      %459 = vmatpush1.bf16.msra.mxu0 0
      %460 = vmatprep.subr.bf16.mxu0 0
      %461 = vmatpush1.bf16.msra.mxu0 0
      %462 = vmatprep.subr.bf16.mxu0 0
      %463 = vmatpush1.bf16.msra.mxu0 %v398
      %464 = vmatprep.subr.bf16.mxu0 0
      %465 = vmatpush2.bf16.msra.mxu0 0
      %466 = vmatprep.subr.bf16.mxu0 0
      %467 = vmatpush2.bf16.msra.mxu0 0
      %468 = vmatprep.subr.bf16.mxu0 0
      %469 = vmatpush2.bf16.msra.mxu0 0
      %470 = vmatprep.subr.bf16.mxu0 0
      %471 = vmatpush2.bf16.msra.mxu0 0
      %472 = vmatprep.subr.bf16.mxu0 0
      %473 = vmatpush2.bf16.msra.mxu0 0
      %474 = vmatprep.subr.bf16.mxu0 0
      %475 = vmatpush2.bf16.msra.mxu0 0
      %476 = vmatprep.subr.bf16.mxu0 0
      %477 = vmatpush2.bf16.msra.mxu0 0
      %478 = vmatprep.subr.bf16.mxu0 0
      %479 = vmatpush2.bf16.msra.mxu0 0
      %480 = vmatprep.mubr.bf16.mxu0 0
      %481 = vmatmul.mubr.bf16.gmra.mxu0 %v446
      %v482 = vpop.f32.mrf.mxu0
      %v483 = vadd.f32 %v392, %v482
      %v484 = vpop.f32.mrf.mxu0
      %v485 = vpop.f32.mrf.mxu0
      %v486 = vpop.f32.mrf.mxu0
      %487 = vdwg.mxu0
      %p488 = scmp.gt.s32.totalorder %s24, 0
      %s489 = scalar_select %p488, 1, 0
      %s490 = scvt.s32.f32 %s489
      %v491 = vstv %s490
      %v492 = vmul.f32 %v483, %v491
      %v493 = vld [vmem:[%s4] sm:$0x1]
      %v494 = vlaneseq
      %v495 = vshrl.u32 %v494, 7
      %v496 = vsub.s32 0, %v495
      %v497 = vrot.slane %v493, %v496
      %v498 = vmul.f32 %v497, %v492
      %v499 = vmul.f32 %v497, %v439
      %v500 = vld [vmem:[%s4 + $0x1] sm:$0x1]
      %v501 = vlaneseq
      %v502 = vshrl.u32 %v501, 7
      %v503 = vsub.s32 0, %v502
      %v504 = vrot.slane %v500, %v503
      %v505 = vmul.f32 %v504, %v492
      %v506 = vmul.f32 %v504, %v439
      %vm509 = vcmask 1046528
      %v510 = vrot.slane %v505, 1
      %v511 = vrot.slane %v506, 1
      %v512 = vsel %vm509, %v510, %v511
      %v515 = vadd.f32 %v498, %v512
      %v516 = vadd.f32 %v499, %v511
      %v517 = vld [vmem:[%s4 + $0x2] sm:$0x1]
      %v518 = vlaneseq
      %v519 = vshrl.u32 %v518, 7
      %v520 = vsub.s32 0, %v519
      %v521 = vrot.slane %v517, %v520
      %v522 = vmul.f32 %v521, %v439
      %v524 = vrot.slane %v522, 2
      %v526 = vadd.f32 %v515, %v524
      %v527 = vadd.f32 %v516, %v524
      %v528 = vld [vmem:[%s5] sm:$0x1]
      %v530 = vlaneseq
      %v531 = vshrl.u32 %v530, 7
      %v532 = vsub.s32 0, %v531
      %v533 = vrot.slane %v528, %v532
      %v535 = vadd.f32 %v526, %v533
      %v536 = vadd.f32 %v527, %v533
      %v537 = vpack.c.bf16 %v536, %v535
      %v539 = vunpack.c.l.b16 %v537
      %v540 = vunpack.c.h.b16 %v537
      %v541 = vpack.c.b16 %v539, %v539
      %v542 = vpack.c.b16 %v540, %v540
      %vm543 = vcmask 1040384
      %vm544 = vcmask 1044484
      %vm545 = vmor %vm543, %vm544
      %v546 = vrot.slane %v541, 7
      %v547 = vrot.slane %v546, 4
      %v548 = vrot.slane %v542, 7
      %v549 = vsel %vm545, %v547, %v548
      %vm551 = vcmask 125952
      %552 = vst.msk [vmem:[%s374] sm:$0xf] %vm551, %v549
      %555 = vrot.lane.b32.xlu0 %v535, 16
      %v556 = vpop.permute.xlu0 %555
      %557 = vrot.lane.b32.xlu0 %v536, 16
      %v558 = vpop.permute.xlu0 %557
      %v561 = vmul.f32 %v535, %v556
      %v562 = vmul.f32 %v536, %v558
      %v563 = vpack.c.bf16 %v562, %v561
      %v565 = vunpack.c.l.b16 %v563
      %v566 = vunpack.c.h.b16 %v563
      %v567 = vpack.c.b16 %v565, %v565
      %v568 = vpack.c.b16 %v566, %v566
      %v569 = vrot.slane %v567, 7
      %v570 = vrot.slane %v569, 4
      %v571 = vrot.slane %v568, 7
      %v572 = vsel %vm545, %v570, %v571
      %573 = vrot.lane.b32.xlu0 %v572, 96
      %v574 = vpop.permute.xlu0 %573
      %576 = vst.msk [vmem:[%s382] sm:$0xf] %vm551, %v574
      %p577 = scmp.lt.s32.totalorder %s23, 1
      %s578 = scalar_select %p577, %s23, 1
      %p579 = scmp.lt.s32.totalorder %s24, 3
      %s580 = scalar_select %p579, %s24, 3
      %s581 = smul.addr %s578, 4
      %s582 = sadd.s32 %s580, %s581
      %s583 = smul.addr %s582, 4
      %s584 = scalar_lea.vmem %s6, %s583
      %p585 = scmp.lt.s32.totalorder %s23, 1
      %s586 = scalar_select %p585, %s23, 1
      %p587 = scmp.lt.s32.totalorder %s24, 3
      %s588 = scalar_select %p587, %s24, 3
      %s589 = smul.addr %s586, 4
      %s590 = sadd.s32 %s588, %s589
      %s591 = smul.addr %s590, 4
      %s592 = scalar_lea.vmem %s7, %s591
      // Predicated region
      $region45: #{tpu_custom_call.1} parent=43 // pred_check
        %p593 = pneg %p197
      $region46: #{tpu_custom_call.1} parent=43 // pred_check_branch
        %595 = sbr.rel (%p593) target = $region48
      $region47: #{tpu_custom_call.1} parent=43 // pred_region
        _
      $region48: #{tpu_custom_call.1} parent=43 // pred_fallthru
        _
      // Predicated region
      $region49: #{tpu_custom_call.1} parent=43 // pred_check
        %p596 = pneg %p225
      $region50: #{tpu_custom_call.1} parent=43 // pred_check_branch
        %598 = sbr.rel (%p596) target = $region52
      $region51: #{tpu_custom_call.1} parent=43 // pred_region
        _
      $region52: #{tpu_custom_call.1} parent=43 // pred_fallthru
        _
    $region44: #{tpu_custom_call.1} parent=5 // pred_fallthru
      _
    %p599 = scmp.le.s32.totalorder 2, %s14
    // Predicated region
    $region53: #{tpu_custom_call.1} parent=5 // pred_check
      %p600 = pneg %p599
    $region54: #{tpu_custom_call.1} parent=5 // pred_check_branch
      %602 = sbr.rel (%p600) target = $region56
    $region55: #{tpu_custom_call.1} parent=5 // pred_region
      %s603 = ssub.s32 %s14, 2
      // Predicated region
      $region57: #{tpu_custom_call.1} parent=55 // pred_check
        %p604 = pneg %p203
      $region58: #{tpu_custom_call.1} parent=55 // pred_check_branch
        %606 = sbr.rel (%p604) target = $region60
      $region59: #{tpu_custom_call.1} parent=55 // pred_region
        %p607 = scmp.lt.s32.totalorder %s25, 1
        %s608 = scalar_select %p607, %s25, 1
        %p609 = scmp.lt.s32.totalorder %s26, 3
        %s610 = scalar_select %p609, %s26, 3
        %s611 = smul.addr %s608, 4
        %s612 = sadd.s32 %s610, %s611
        %s613 = smul.addr %s612, 4
        %s614 = scalar_lea.vmem %s6, %s613
      $region60: #{tpu_custom_call.1} parent=55 // pred_fallthru
        _
      // Predicated region
      $region61: #{tpu_custom_call.1} parent=55 // pred_check
        %p615 = pneg %p231
      $region62: #{tpu_custom_call.1} parent=55 // pred_check_branch
        %617 = sbr.rel (%p615) target = $region64
      $region63: #{tpu_custom_call.1} parent=55 // pred_region
        %p618 = scmp.lt.s32.totalorder %s25, 1
        %s619 = scalar_select %p618, %s25, 1
        %p620 = scmp.lt.s32.totalorder %s26, 3
        %s621 = scalar_select %p620, %s26, 3
        %s622 = smul.addr %s619, 4
        %s623 = sadd.s32 %s621, %s622
        %s624 = smul.addr %s623, 4
        %s625 = scalar_lea.vmem %s7, %s624
      $region64: #{tpu_custom_call.1} parent=55 // pred_fallthru
        _
    $region56: #{tpu_custom_call.1} parent=5 // pred_fallthru
      _
  $region6: #{tpu_custom_call.1} parent=0 // loop_footer
    %s18 = sadd.s32 1, %s14
  $region7: #{tpu_custom_call.1} parent=0 // loop_footer_branch
    %13 = sbr.rel target = $region3
  $region8: #{tpu_custom_call.1} parent=0 // loop_exit
    _

</llo_original>
